<compile_context>
chip_gen: v6e
topology: v6e:2x2x1
jax: 0.10.0
libtpu: 0.0.40
codegen_flags: <defaults>
</compile_context>

<pallas_src>
import functools

import jax
import jax.numpy as jnp
import numpy as np
from jax.experimental import pallas as pl
from jax.experimental.pallas import tpu as pltpu


def _round_up(x, m):
    return ((x + m - 1) // m) * m


def _cdiv(a, b):
    return (a + b - 1) // b


def _block_vmem_bytes(shape, bytes_per=4, buffers=2):
    """VMEM footprint of one pipelined block, padded to (8, 128) tiles."""
    if len(shape) == 1:
        shape = (1,) + tuple(shape)
    padded = list(shape)
    padded[-1] = _round_up(padded[-1], 128)
    padded[-2] = _round_up(padded[-2], 8)
    n = 1
    for d in padded:
        n *= d
    return buffers * bytes_per * n


def _tpu_vmem_capacity_bytes():
    """Best-effort per-TensorCore VMEM capacity; conservative fallback."""
    try:
        return int(pltpu.get_tpu_info().vmem_capacity_bytes)
    except Exception:
        pass
    try:
        kind = jax.devices()[0].device_kind.lower()
        if "v7" in kind:
            return 64 << 20
        return 128 << 20
    except Exception:
        return 64 << 20


def _vmem_budget():
    """(tile_budget_bytes, is_small_vmem).  Small VMEM ~ v7x (64 MiB/TC, 2 TC)."""
    cap = _tpu_vmem_capacity_bytes()
    if cap >= (100 << 20):          # v5e / v6e: 128 MiB VMEM
        return 80 << 20, False
    return 28 << 20, True           # v7x: 64 MiB per TC, keep headroom


def prepare_bacon_params(weight, bias=None):
    """One-time layout plumbing (do at init time, NOT per call).

    weight: (out_f, in_f)    -> weight_t: (in_f, out_f_p) f32, lane-dense padded
    bias:   (out_f,) or None -> bias_row: (1, out_f_p) f32
    Returns (weight_t, bias_row, out_f).
    """
    out_f, in_f = weight.shape
    # Lane-dense output; prefer 256-aligned N (fills the 2x256x256 MXU on
    # v6e/v7x) when the extra padding is small (<= ~15%).
    out_128 = _round_up(out_f, 128)
    out_256 = _round_up(out_f, 256)
    if (out_256 - out_f) <= max(32, (15 * out_f) // 100):
        out_f_p = out_256
    else:
        out_f_p = out_128

    weight_t = jnp.asarray(weight, jnp.float32).T            # (in_f, out_f)
    if bias is None:
        bias_row = jnp.zeros((1, out_f), jnp.float32)
    else:
        bias_row = jnp.asarray(bias, jnp.float32).reshape(1, out_f)
    if out_f_p != out_f:
        weight_t = jnp.pad(weight_t, ((0, 0), (0, out_f_p - out_f)))
        bias_row = jnp.pad(bias_row, ((0, 0), (0, out_f_p - out_f)))
    return weight_t, bias_row, out_f


def _bacon_kernel_resident(x_ref, w_ref, b_ref, o_ref):
    # Weight/bias block indices are constant across the batch grid -> DMA'd
    # once, VMEM-resident.  MXU matmul, bias + sin on VPU.
    acc = jnp.dot(x_ref[...], w_ref[...], preferred_element_type=jnp.float32)
    o_ref[...] = jnp.sin(acc + b_ref[...]).astype(o_ref.dtype)


def _bacon_kernel_tiled(x_ref, w_ref, b_ref, o_ref, acc_ref):
    # Fallback for weights too large to keep VMEM-resident: accumulate over the
    # (optional) K axis, apply bias + sin only on the last K step.
    k = pl.program_id(2)

    @pl.when(k == 0)
    def _():
        acc_ref[...] = jnp.zeros_like(acc_ref)

    acc_ref[...] += jnp.dot(x_ref[...], w_ref[...],
                            preferred_element_type=jnp.float32)

    @pl.when(k == pl.num_programs(2) - 1)
    def _():
        o_ref[...] = jnp.sin(acc_ref[...] + b_ref[...]).astype(o_ref.dtype)


@functools.partial(jax.jit, static_argnames=("out_f",))
def bacon_fourier_layer(x, weight_t, bias_row, *, out_f):
    """x: (..., in_f); weight_t/bias_row from prepare_bacon_params()."""
    in_f, out_f_p = weight_t.shape
    x = x.astype(jnp.float32)          # keep large sin phases in f32
    lead_shape = x.shape[:-1]
    x2 = x.reshape(-1, in_f)
    B = x2.shape[0]

    budget, small_vmem = _vmem_budget()

    # ---- batch tile: clamp to real batch, balance across tiles ------------
    B8 = _round_up(max(B, 1), 8)
    n_bt = _cdiv(B8, 512)
    if small_vmem and B8 >= 16:
        n_bt = max(n_bt, 2)            # give both v7x TensorCores a batch tile
    tb = _round_up(_cdiv(B8, n_bt), 8)

    w_bytes = _block_vmem_bytes((in_f, out_f_p))
    b_bytes = _block_vmem_bytes((1, out_f_p))

    def resident_bytes(tb_):
        return (w_bytes + b_bytes
                + _block_vmem_bytes((tb_, in_f))
                + _block_vmem_bytes((tb_, out_f_p)))

    cost = pl.CostEstimate(
        flops=2 * B * in_f * out_f,
        transcendentals=B * out_f,
        bytes_accessed=4 * (B * in_f + in_f * out_f_p + B * out_f_p),
    )

    if resident_bytes(8) <= budget:
        # ---- primary path: weight stays VMEM-resident, 1-D batch grid -----
        while tb > 8 and resident_bytes(tb) > budget:
            tb = _round_up(tb // 2, 8)
        B_p = _round_up(B8, tb)
        x_p = x2 if B_p == B else jnp.pad(x2, ((0, B_p - B), (0, 0)))
        vmem_limit = min(resident_bytes(tb) + (8 << 20), budget + (16 << 20))

        out_padded = pl.pallas_call(
            _bacon_kernel_resident,
            out_shape=jax.ShapeDtypeStruct((B_p, out_f_p), jnp.float32),
            grid_spec=pltpu.PrefetchScalarGridSpec(
                num_scalar_prefetch=0,
                grid=(B_p // tb,),
                in_specs=[
                    pl.BlockSpec((tb, in_f), lambda i: (i, 0)),        # x tile
                    pl.BlockSpec((in_f, out_f_p), lambda i: (0, 0)),   # weight
                    pl.BlockSpec((1, out_f_p), lambda i: (0, 0)),      # bias
                ],
                out_specs=pl.BlockSpec((tb, out_f_p), lambda i: (i, 0)),
            ),
            compiler_params=pltpu.CompilerParams(
                dimension_semantics=("parallel",),
                vmem_limit_bytes=int(vmem_limit),
            ),
            cost_estimate=cost,
        )(x_p, weight_t, bias_row)
    else:
        # ---- fallback: tile N (and K if needed), f32 accumulator ----------
        tn = 128
        for cand in (512, 256):
            if out_f_p % cand == 0:
                tn = cand
                break
        tk = in_f

        def tiled_bytes(tb_, tn_, tk_):
            return (_block_vmem_bytes((tb_, tk_))
                    + _block_vmem_bytes((tk_, tn_))
                    + _block_vmem_bytes((tb_, tn_))
                    + _block_vmem_bytes((1, tn_))
                    + _block_vmem_bytes((tb_, tn_), buffers=1))  # accumulator

        # Shrink K first (keeps MXU-friendly tb/tn), then tn, then tb.
        while tiled_bytes(tb, tn, tk) > budget and tk > 128:
            tk = _round_up(tk // 2, 128)
        while tiled_bytes(tb, tn, tk) > budget and tn > 128:
            tn //= 2
        while tiled_bytes(tb, tn, tk) > budget and tb > 8:
            tb = _round_up(tb // 2, 8)

        grid_k = _cdiv(in_f, tk)
        in_f_p = grid_k * tk
        B_p = _round_up(B8, tb)
        x_p = x2
        if (B_p, in_f_p) != (B, in_f):
            x_p = jnp.pad(x2, ((0, B_p - B), (0, in_f_p - in_f)))
        w_p = weight_t
        if in_f_p != in_f:
            w_p = jnp.pad(weight_t, ((0, in_f_p - in_f), (0, 0)))

        grid_i = B_p // tb
        grid_j = out_f_p // tn
        # When K is unsplit, the operand on the outer axis is the one that gets
        # re-read; pick the ordering with the smaller redundant HBM traffic.
        batch_outer = ((grid_i - 1) * in_f_p * out_f_p
                       <= (grid_j - 1) * B_p * in_f_p)
        if batch_outer:
            grid = (grid_i, grid_j, grid_k)
            x_map = lambda i, j, k: (i, k)
            w_map = lambda i, j, k: (k, j)
            b_map = lambda i, j, k: (0, j)
            o_map = lambda i, j, k: (i, j)
        else:
            grid = (grid_j, grid_i, grid_k)
            x_map = lambda j, i, k: (i, k)
            w_map = lambda j, i, k: (k, j)
            b_map = lambda j, i, k: (0, j)
            o_map = lambda j, i, k: (i, j)

        vmem_limit = min(tiled_bytes(tb, tn, tk) + (8 << 20), budget + (16 << 20))
        out_padded = pl.pallas_call(
            _bacon_kernel_tiled,
            out_shape=jax.ShapeDtypeStruct((B_p, out_f_p), jnp.float32),
            grid_spec=pltpu.PrefetchScalarGridSpec(
                num_scalar_prefetch=0,
                grid=grid,
                in_specs=[
                    pl.BlockSpec((tb, tk), x_map),
                    pl.BlockSpec((tk, tn), w_map),
                    pl.BlockSpec((1, tn), b_map),
                ],
                out_specs=pl.BlockSpec((tb, tn), o_map),
                scratch_shapes=[pltpu.VMEM((tb, tn), jnp.float32)],
            ),
            compiler_params=pltpu.CompilerParams(
                dimension_semantics=("parallel", "parallel", "arbitrary"),
                vmem_limit_bytes=int(vmem_limit),
            ),
            cost_estimate=cost,
        )(x_p, w_p, bias_row)

    out = out_padded[:B, :out_f]
    return out.reshape(*lead_shape, out_f)


def init_bacon_params(key, in_features, out_features, quantization=8,
                      max_freq=1024.0, add_bias=True):
    """Deterministic re-implementation of BaconFourierLayer.__init__."""
    k_w, k_b = jax.random.split(key)
    frequency_quant = max_freq / quantization
    quant_indices = jax.random.randint(
        k_w, (out_features, in_features), -quantization, quantization,
        dtype=jnp.int32)
    weight = quant_indices.astype(jnp.float32) * frequency_quant   # (out, in)
    if add_bias:
        bias = jax.random.uniform(k_b, (out_features,), minval=-np.pi,
                                  maxval=np.pi, dtype=jnp.float32)
    else:
        bias = None
    return weight, bias


def _check(out, x, weight, bias):
    # Pure-JAX reference (same math as torch.sin(F.linear(x, W, b))).
    phase = np.asarray(x @ weight.T + (0.0 if bias is None else bias))
    ref = np.sin(phase)
    # sin phases reach O(1e3-1e4): tolerance scales with |phase| * f32 ulp
    # (Mosaic vs XLA f32 matmul decomposition can round differently).
    atol = float(np.max(np.abs(phase)) * np.finfo(np.float32).eps * 8 + 1e-6)
    np.testing.assert_allclose(np.asarray(out), ref, rtol=1e-5, atol=atol)


if __name__ == "__main__":
    key = jax.random.PRNGKey(0)
    k_p1, k_x1, k_p2, k_x2 = jax.random.split(key, 4)

    # Case 1: small hidden-layer shapes.
    batch, in_features, out_features = 8, 32, 64
    weight, bias = init_bacon_params(k_p1, in_features, out_features)
    weight_t, bias_row, out_f = prepare_bacon_params(weight, bias)  # one-time
    x = jax.random.normal(k_x1, (batch, in_features), dtype=jnp.float32)
    out = jax.block_until_ready(
        bacon_fourier_layer(x, weight_t, bias_row, out_f=out_f))
    _check(out, x, weight, bias)

    # Case 2: typical BACON input layer (coords -> features), ragged sizes.
    batch2, in2, out2 = 13, 3, 200
    weight2, bias2 = init_bacon_params(k_p2, in2, out2)
    weight2_t, bias2_row, out_f2 = prepare_bacon_params(weight2, bias2)
    x2 = jax.random.uniform(k_x2, (batch2, in2), minval=-1.0, maxval=1.0,
                            dtype=jnp.float32)
    out2_arr = jax.block_until_ready(
        bacon_fourier_layer(x2, weight2_t, bias2_row, out_f=out_f2))
    _check(out2_arr, x2, weight2, bias2)

    print("KERNEL_OK")
</pallas_src>

<mosaic_0001>
module attributes {stable_mosaic.version = 11 : i64} {
  func.func @_bacon_kernel_resident(%arg0: i32, %arg1: memref<8x32xf32, #tpu.memory_space<vmem>>, %arg2: memref<32x128xf32, #tpu.memory_space<vmem>>, %arg3: memref<1x128xf32, #tpu.memory_space<vmem>>, %arg4: memref<8x128xf32, #tpu.memory_space<vmem>>) attributes {dimension_semantics = [#tpu.dimension_semantics<parallel>], iteration_bounds = array<i64: 1>, scalar_prefetch = 0 : i64, scratch_operands = 0 : i64, tpu.core_type = #tpu.core_type<tc>, window_params = [{transform_indices = @transform_0, window_bounds = array<i64: 8, 32>}, {pipeline_mode = #tpu.pipeline_mode<synchronous>, transform_indices = @transform_1, window_bounds = array<i64: 32, 128>}, {pipeline_mode = #tpu.pipeline_mode<synchronous>, transform_indices = @transform_2, window_bounds = array<i64: 1, 128>}, {transform_indices = @transform_3, window_bounds = array<i64: 8, 128>}]} {
    %c0 = arith.constant 0 : index
    %c0_0 = arith.constant 0 : index
    %0 = vector.load %arg1[%c0, %c0_0] : memref<8x32xf32, #tpu.memory_space<vmem>>, vector<8x32xf32>
    %c0_1 = arith.constant 0 : index
    %c0_2 = arith.constant 0 : index
    %1 = vector.load %arg2[%c0_1, %c0_2] : memref<32x128xf32, #tpu.memory_space<vmem>>, vector<32x128xf32>
    %cst = arith.constant dense<0.000000e+00> : vector<8x128xf32>
    %2 = tpu.matmul %0, %1, %cst {dimension_numbers = #tpu.dot_dimension_numbers<[1], [0], [0], [1], [0, 0, 1, 1], [], []>} : vector<8x32xf32>, vector<32x128xf32>, vector<8x128xf32> -> vector<8x128xf32>
    %c0_3 = arith.constant 0 : index
    %c0_4 = arith.constant 0 : index
    %3 = vector.load %arg3[%c0_3, %c0_4] : memref<1x128xf32, #tpu.memory_space<vmem>>, vector<1x128xf32>
    %4 = vector.broadcast %3 : vector<1x128xf32> to vector<8x128xf32>
    %5 = arith.addf %2, %4 : vector<8x128xf32>
    %6 = math.sin %5 : vector<8x128xf32>
    %c0_5 = arith.constant 0 : index
    %c0_6 = arith.constant 0 : index
    %7 = vector.load %arg4[%c0_5, %c0_6] : memref<8x128xf32, #tpu.memory_space<vmem>>, vector<8x128xf32>
    tpu.vector_store %arg4[%c0_5, %c0_6], %6 {strides = array<i32>} : memref<8x128xf32, #tpu.memory_space<vmem>>, vector<8x128xf32>,
    return
  }
  func.func @transform_0(%arg0: i32) -> (i32, i32) {
    %c0_i32 = arith.constant 0 : i32
    %c0_i32_0 = arith.constant 0 : i32
    return %arg0, %c0_i32 : i32, i32
  }
  func.func @transform_1(%arg0: i32) -> (i32, i32) {
    %c0_i32 = arith.constant 0 : i32
    %c0_i32_0 = arith.constant 0 : i32
    %c0_i32_1 = arith.constant 0 : i32
    return %c0_i32, %c0_i32_0 : i32, i32
  }
  func.func @transform_2(%arg0: i32) -> (i32, i32) {
    %c0_i32 = arith.constant 0 : i32
    %c0_i32_0 = arith.constant 0 : i32
    %c0_i32_1 = arith.constant 0 : i32
    return %c0_i32, %c0_i32_0 : i32, i32
  }
  func.func @transform_3(%arg0: i32) -> (i32, i32) {
    %c0_i32 = arith.constant 0 : i32
    %c0_i32_0 = arith.constant 0 : i32
    return %arg0, %c0_i32 : i32, i32
  }
}

</mosaic_0001>

<llo_original>
// kernel: bacon_fourier_layer.1
$region0: #{bacon_fourier_layer.1}
  #allocation0 [shape = 'u32[]', space=smem, size = 0x4, offset = 0x4, fixed_abs, tag = 'smem constant byte address 0x4 - core index']
  #allocation1 [shape = 'u32[144,128]{1,0:T(1,128)}', space=vmem, size = 0x12000, scoped, tag = 'internal scratch']
  %s0 = inlined_call_operand.hbm [shape: f32[8,32], index: 0, kind: input, shape index: {}]
  %s1 = inlined_call_operand.hbm [shape: f32[32,128], index: 1, kind: input, shape index: {}]
  %s2 = inlined_call_operand.vmem [shape: f32[1,128], index: 2, kind: input, shape index: {}]
  %s3 = inlined_call_operand.hbm [shape: f32[8,128], index: 3, kind: output, shape index: {}]
  %s4 = sld [smem:[#allocation0]]
  $region30: #{bacon_fourier_layer.1} parent=0
    _
  %s6 = ssub.s32 1, %s4
  %s7 = scalar_select 0, %s6, %s4
  $region1: #{bacon_fourier_layer.1} parent=0
    #allocation2 [shape = 'u8[4096]{0}', space=vmem, size = 0x1000, scoped, tag = 'input window, operand 0, single buffered']
    #allocation3 [shape = 's32[1]{0}', space=sflag, size = 0x4, scoped, tag = 'scoped memory for bacon_fourier_layer.1']
    #allocation4 [shape = 's32[1]{0}', space=sflag, size = 0x4, scoped, tag = 'scoped memory for bacon_fourier_layer.1']
    #allocation5 [shape = 'u8[16384]{0}', space=vmem, size = 0x4000, scoped, tag = 'input window, operand 1, single buffered']
    #allocation6 [shape = 's32[1]{0}', space=sflag, size = 0x4, scoped, tag = 'scoped memory for bacon_fourier_layer.1']
    #allocation7 [shape = 'u8[4096]{0}', space=vmem, size = 0x1000, scoped, tag = 'output window, operand 0, single buffered']
    %8 = vsyncpa [#allocation3], 0
    %9 = vsyncpa [#allocation6], 0
    %10 = vsyncpa [#allocation4], 0
    // Predicated region
    $region2: #{bacon_fourier_layer.1} parent=1 // pred_check
      _
    $region3: #{bacon_fourier_layer.1} parent=1 // pred_check_branch
      %12 = sbr.rel (0) target = $region5
    $region4: #{bacon_fourier_layer.1} parent=1 // pred_region
      %s14 = ssub.s32 128, 128
      %15 = vsyncadd [#allocation3], %s14
      %s17 = sshll.u32 [#allocation2], 4
      %s18 = int_to_ptr.vmem [resolvable:$true] %s17
      %20 = dma.hbm_to_vmem [thread:$0]  %s0, 128, %s18, [#allocation3]
    $region5: #{bacon_fourier_layer.1} parent=1 // pred_fallthru
      _
    // Predicated region
    $region6: #{bacon_fourier_layer.1} parent=1 // pred_check
      _
    $region7: #{bacon_fourier_layer.1} parent=1 // pred_check_branch
      %22 = sbr.rel (0) target = $region9
    $region8: #{bacon_fourier_layer.1} parent=1 // pred_region
      %s24 = ssub.s32 512, 512
      %25 = vsyncadd [#allocation6], %s24
      %s26 = sshll.u32 [#allocation5], 4
      %s27 = int_to_ptr.vmem [resolvable:$true] %s26
      %32 = dma.hbm_to_vmem [thread:$0]  %s1, 512, %s27, [#allocation6], 128, 128, 8
    $region9: #{bacon_fourier_layer.1} parent=1 // pred_fallthru
      _
    // Predicated region
    $region10: #{bacon_fourier_layer.1} parent=1 // pred_check
      _
    $region11: #{bacon_fourier_layer.1} parent=1 // pred_check_branch
      %34 = sbr.rel (0) target = $region13
    $region12: #{bacon_fourier_layer.1} parent=1 // pred_region
      _
    $region13: #{bacon_fourier_layer.1} parent=1 // pred_fallthru
      _
    // Predicated region
    $region14: #{bacon_fourier_layer.1} parent=1 // pred_check
      _
    $region15: #{bacon_fourier_layer.1} parent=1 // pred_check_branch
      %36 = sbr.rel (0) target = $region17
    $region16: #{bacon_fourier_layer.1} parent=1 // pred_region
      %37 = dma.done [#allocation3], 128
    $region17: #{bacon_fourier_layer.1} parent=1 // pred_fallthru
      _
    // Predicated region
    $region18: #{bacon_fourier_layer.1} parent=1 // pred_check
      _
    $region19: #{bacon_fourier_layer.1} parent=1 // pred_check_branch
      %39 = sbr.rel (0) target = $region21
    $region20: #{bacon_fourier_layer.1} parent=1 // pred_region
      %40 = dma.done [#allocation6], 512
    $region21: #{bacon_fourier_layer.1} parent=1 // pred_fallthru
      _
    %v41 = vld [vmem:[#allocation2] sm:$0xff]
    %v42 = vld [vmem:[#allocation5] sm:$0xff]
    %v43 = vld [vmem:[#allocation5 + $0x8] sm:$0xff]
    %v44 = vld [vmem:[#allocation5 + $0x10] sm:$0xff]
    %v45 = vld [vmem:[#allocation5 + $0x18] sm:$0xff]
    %v46 = vld [vmem:[%s2] sm:$0x1]
    %v48 = vlaneseq
    %v49 = vshrl.u32 %v48, 7
    %v50 = vsub.s32 0, %v49
    %v51 = vrot.slane %v46, %v50
    %vm53 = vcmask 261120
    %v55 = vsel %vm53, %v41, 0
    %57 = vmatprep.subr.mxu0 0.0
    %58 = vmatpush1.msra.mxu0 0.0
    %59 = vmatprep.subr.mxu0 0.0
    %60 = vmatpush1.msra.mxu0 0.0
    %61 = vmatprep.subr.mxu0 0.0
    %62 = vmatpush1.msra.mxu0 0.0
    %63 = vmatprep.subr.mxu0 0.0
    %64 = vmatpush1.msra.mxu0 0.0
    %65 = vmatprep.subr.mxu0 0.0
    %66 = vmatpush1.msra.mxu0 0.0
    %67 = vmatprep.subr.mxu0 0.0
    %68 = vmatpush1.msra.mxu0 0.0
    %69 = vmatprep.subr.mxu0 0.0
    %70 = vmatpush1.msra.mxu0 0.0
    %71 = vmatprep.subr.mxu0 0.0
    %72 = vmatpush1.msra.mxu0 0.0
    %73 = vmatprep.subr.mxu0 0.0
    %74 = vmatpush1.msra.mxu0 0.0
    %75 = vmatprep.subr.mxu0 0.0
    %76 = vmatpush1.msra.mxu0 0.0
    %77 = vmatprep.subr.mxu0 0.0
    %78 = vmatpush1.msra.mxu0 0.0
    %79 = vmatprep.subr.mxu0 0.0
    %80 = vmatpush1.msra.mxu0 0.0
    %81 = vmatprep.subr.mxu0 0.0
    %82 = vmatpush1.msra.mxu0 %v45
    %83 = vmatprep.subr.mxu0 0.0
    %84 = vmatpush1.msra.mxu0 %v44
    %85 = vmatprep.subr.mxu0 0.0
    %86 = vmatpush1.msra.mxu0 %v43
    %87 = vmatprep.subr.mxu0 0.0
    %88 = vmatpush1.msra.mxu0 %v42
    %89 = vmatprep.subr.mxu0 0.0
    %90 = vmatpush2.msra.mxu0 0.0
    %91 = vmatprep.subr.mxu0 0.0
    %92 = vmatpush2.msra.mxu0 0.0
    %93 = vmatprep.subr.mxu0 0.0
    %94 = vmatpush2.msra.mxu0 0.0
    %95 = vmatprep.subr.mxu0 0.0
    %96 = vmatpush2.msra.mxu0 0.0
    %97 = vmatprep.subr.mxu0 0.0
    %98 = vmatpush2.msra.mxu0 0.0
    %99 = vmatprep.subr.mxu0 0.0
    %100 = vmatpush2.msra.mxu0 0.0
    %101 = vmatprep.subr.mxu0 0.0
    %102 = vmatpush2.msra.mxu0 0.0
    %103 = vmatprep.subr.mxu0 0.0
    %104 = vmatpush2.msra.mxu0 0.0
    %105 = vmatprep.subr.mxu0 0.0
    %106 = vmatpush2.msra.mxu0 0.0
    %107 = vmatprep.subr.mxu0 0.0
    %108 = vmatpush2.msra.mxu0 0.0
    %109 = vmatprep.subr.mxu0 0.0
    %110 = vmatpush2.msra.mxu0 0.0
    %111 = vmatprep.subr.mxu0 0.0
    %112 = vmatpush2.msra.mxu0 0.0
    %113 = vmatprep.subr.mxu0 0.0
    %114 = vmatpush2.msra.mxu0 0.0
    %115 = vmatprep.subr.mxu0 0.0
    %116 = vmatpush2.msra.mxu0 0.0
    %117 = vmatprep.subr.mxu0 0.0
    %118 = vmatpush2.msra.mxu0 0.0
    %119 = vmatprep.subr.mxu0 0.0
    %120 = vmatpush2.msra.mxu0 0.0
    %121 = vmatprep.mubr.f32.mxu0 0.0
    %122 = vmatmul.mubr.f32.gmra.mxu0 %v55
    %v123 = vpop.f32.mrf.mxu0
    %v124 = vadd.f32 %v51, %v123
    %v125 = vpop.f32.mrf.mxu0
    %126 = vdwg.mxu0
    %v127 = vand.u32 2147483647, %v124
    %vm128 = vcmp.le.f32.partialorder %v127, 0.7853982
    %vm129 = vcmp.lt.s32.totalorder %v124, 0
    %v130 = vand.u32 %v124, 2139095040
    %v131 = vshrl.u32 %v130, 23
    %v132 = vsub.s32 %v131, 127
    %v133 = vand.u32 2147483647, %v124
    %v134 = vand.u32 %v133, 8388607
    %v135 = vor.u32 %v134, 8388608
    %v136 = vsub.s32 0, %v135
    %v137 = vadd.s32 %v132, 1
    %vm138 = vcmp.gt.s32.totalorder %v137, 0
    %v139 = vsel %vm138, %v137, 0
    %v140 = vshrl.u32 %v139, 5
    %v141 = vand.u32 %v139, 31
    %v142 = vsub.s32 32, %v141
    %v143 = vshrl.u32 683565275, %v142
    %v144 = vshll.u32 683565275, %v141
    %v145 = vshrl.u32 2475754826, %v142
    %v146 = vor.u32 %v144, %v145
    %v147 = vshll.u32 2475754826, %v141
    %v148 = vshrl.u32 2131351028, %v142
    %v149 = vor.u32 %v147, %v148
    %v150 = vshll.u32 2131351028, %v141
    %v151 = vshrl.u32 2102212464, %v142
    %v152 = vor.u32 %v150, %v151
    %v153 = vshll.u32 2102212464, %v141
    %v154 = vshrl.u32 920167782, %v142
    %v155 = vor.u32 %v153, %v154
    %v156 = vshll.u32 920167782, %v141
    %v157 = vshrl.u32 1326507024, %v142
    %v158 = vor.u32 %v156, %v157
    %vm159 = vcmp.lt.s32.totalorder %v140, 1
    %vm160 = vcmp.lt.s32.totalorder %v140, 2
    %vm161 = vcmp.lt.s32.totalorder %v140, 3
    %vm162 = vcmp.lt.s32.totalorder %v140, 4
    %v163 = vsel %vm159, %v143, %v146
    %v164 = vsel %vm162, %v152, 2102212464
    %v165 = vsel %vm161, %v149, %v164
    %v166 = vsel %vm160, %v163, %v165
    %v167 = vsel %vm159, %v146, %v149
    %v168 = vsel %vm162, %v155, 920167782
    %v169 = vsel %vm161, %v152, %v168
    %v170 = vsel %vm160, %v167, %v169
    %v171 = vsel %vm159, %v149, %v152
    %v172 = vsel %vm162, %v158, 1326507024
    %v173 = vsel %vm161, %v155, %v172
    %v174 = vsel %vm160, %v171, %v173
    %v175 = vshll.u32 %v135, 8
    %v176 = vmul.u32.u64.compose %v175, %v174
    %v177 = vextract.low.u32 %v176
    %v178 = vextract.high.u32 %v176
    %v179 = vmul.u32.u64.compose %v175, %v170
    %v180 = vextract.low.u32 %v179
    %v181 = vextract.high.u32 %v179
    %v182 = vmul.u32 %v175, %v166
    %v183 = vadd.s32 %v178, %v180
    %vm184 = vc.u32 %v178, %v180
    %v185 = vadd.s32 %v181, 1
    %v186 = vsel %vm184, %v185, %v181
    %v187 = vadd.s32 %v182, %v186
    %v188 = vadd.s32 %v187, 536870912
    %v189 = vshrl.u32 %v188, 30
    %v190 = vshll.u32 %v189, 30
    %v191 = vsub.s32 %v187, %v190
    %vm192 = vcmp.lt.s32.totalorder %v191, 0
    %v193 = vsub.s32 0, %v191
    %v194 = vsel %vm192, %v193, %v191
    %v195 = vclz %v194
    %v196 = vsub.s32 %v195, 2
    %vm197 = vcmp.gt.s32.totalorder 0, %v196
    %v198 = vsel %vm197, 0, %v196
    %v199 = vsub.s32 32, %v198
    %v200 = vshll.u32 %v191, %v198
    %v201 = vshrl.u32 %v183, %v199
    %v202 = vor.u32 %v200, %v201
    %v203 = vsub.s32 4294967266, %v198
    %v204 = vadd.s32 %v203, 127
    %v205 = vshll.u32 %v204, 23
    %v206 = vor.u32 4788187, %v205
    %v207 = vand.u32 2147483647, %v206
    %v209 = vcvt.s32.f32 %v202
    %v210 = vmul.f32 %v209, %v207
    %v211 = vxor.u32 %v210, 2147483648
    %v212 = vsel %vm129, %v211, %v210
    %v213 = vsub.s32 4, %v189
    %v214 = vsel %vm129, %v213, %v189
    %v215 = vsel %vm128, %v124, %v212
    %v216 = vsel %vm128, 0, %v214
    %v217 = vcosq.f32.pop %v215
    %v218 = vsinq.f32.pop %v215
    %vm219 = vweird.f32 %v124
    %v220 = vadd.s32 %v216, 3
    %v221 = vand.u32 %v220, 3
    %vm222 = vcmp.lt.s32.totalorder %v221, 2
    %vm223 = vcmp.eq.s32.totalorder %v221, 0
    %v224 = vxor.u32 %v218, 2147483648
    %v225 = vsel %vm223, %v217, %v224
    %vm226 = vcmp.eq.s32.totalorder %v221, 2
    %v227 = vxor.u32 %v217, 2147483648
    %v228 = vsel %vm226, %v227, %v218
    %v229 = vsel %vm222, %v225, %v228
    %v230 = vsel %vm219, nan, %v229
    %231 = vst [vmem:[#allocation7] sm:$0xff] %v230
    // Predicated region
    $region22: #{bacon_fourier_layer.1} parent=1 // pred_check
      _
    $region23: #{bacon_fourier_layer.1} parent=1 // pred_check_branch
      %233 = sbr.rel (0) target = $region25
    $region24: #{bacon_fourier_layer.1} parent=1 // pred_region
      %s235 = ssub.s32 128, 128
      %236 = vsyncadd [#allocation4], %s235
      %s238 = sshll.u32 [#allocation7], 4
      %s239 = int_to_ptr.vmem [resolvable:$true] %s238
      %241 = dma.vmem_to_hbm [thread:$0]  %s239, 128, %s3, [#allocation4]
    $region25: #{bacon_fourier_layer.1} parent=1 // pred_fallthru
      _
    // Predicated region
    $region26: #{bacon_fourier_layer.1} parent=1 // pred_check
      _
    $region27: #{bacon_fourier_layer.1} parent=1 // pred_check_branch
      %243 = sbr.rel (0) target = $region29
    $region28: #{bacon_fourier_layer.1} parent=1 // pred_region
      %244 = dma.done [#allocation4], 128
    $region29: #{bacon_fourier_layer.1} parent=1 // pred_fallthru
      _
    %245 = vsyncpa [#allocation3], 1
    %246 = vsyncpa [#allocation6], 1
    %247 = vsyncpa [#allocation4], 1

</llo_original>
